<compile_context>
chip_gen: v7x
topology: tpu7x:2x2x1
jax: 0.10.0
libtpu: 0.0.40
codegen_flags: <defaults>
</compile_context>

<pallas_src>
import jax
import jax.numpy as jnp
from jax.experimental import pallas as pl
from jax.experimental.pallas import tpu as pltpu


def _round_up(x, m):
    return ((x + m - 1) // m) * m


def critic_kernel(x_ref, w1_ref, w2_ref, q_ref):
    # x:  [bb, Kp]   w1: [Kp, Hp]   w2: [1, Hp]   q: [bb, 1]
    y = jnp.maximum(
        jnp.dot(x_ref[...], w1_ref[...], preferred_element_type=jnp.float32), 0.0
    )
    # VPU multiply + XLU lane reduce replaces the N=1 MXU matmul; b2 is carried
    # in the spare lane (y[:, H] == 1, w2[0, H] == b2).
    q = jnp.sum(y * w2_ref[...], axis=-1, keepdims=True)
    q_ref[...] = q.astype(q_ref.dtype)


def pack_params(w1_s, w1_a, b1, lin_w, lin_b):
    """Pack all parameters into two lane-dense slabs (done once on the host)."""
    sd, H = w1_s.shape
    ad = w1_a.shape[0]
    K = sd + ad + 1                      # + 1 for the constant-1 bias column
    Kp = _round_up(K, 8)
    Hp = _round_up(H + 1, 128)           # >= 1 spare lane to carry b2

    W1 = jnp.zeros((Kp, Hp), jnp.float32)
    W1 = W1.at[:sd, :H].set(w1_s)
    W1 = W1.at[sd:sd + ad, :H].set(w1_a)
    W1 = W1.at[sd + ad, :H].set(b1.reshape(H))   # b1 folded into the matmul
    W1 = W1.at[sd + ad, H].set(1.0)              # makes y[:, H] == relu(1) == 1

    W2 = jnp.zeros((1, Hp), jnp.float32)
    W2 = W2.at[0, :H].set(lin_w.reshape(H))      # linear.weight  ([1, H] in torch)
    W2 = W2.at[0, H].set(lin_b.reshape(()))      # linear.bias carried by spare lane

    return W1, W2, Kp, Hp


def pack_inputs(states, actions, Kp, B_pad):
    """Pack states/actions/ones into one contiguous [B_pad, Kp] buffer."""
    B = states.shape[0]
    sd = states.shape[1]
    ad = actions.shape[1]
    x = jnp.zeros((B_pad, Kp), jnp.float32)
    x = x.at[:B, :sd].set(states)
    x = x.at[:B, sd:sd + ad].set(actions)
    x = x.at[:B, sd + ad].set(1.0)               # constant-1 column for b1
    return x


def critic_forward(states, actions, w1_s, w1_a, b1, lin_w, lin_b):
    B = states.shape[0]
    W1, W2, Kp, Hp = pack_params(w1_s, w1_a, b1, lin_w, lin_b)

    # Batch tiling: one grid step at B=8; 256-row tiles sharded across both
    # TensorCores (v7x) for real training batch sizes.
    block_b = min(256, _round_up(B, 8))
    B_pad = _round_up(B, block_b)
    nb = B_pad // block_b

    x = pack_inputs(states, actions, Kp, B_pad)

    q = pl.pallas_call(
        critic_kernel,
        out_shape=jax.ShapeDtypeStruct((B_pad, 1), jnp.float32),
        grid_spec=pltpu.PrefetchScalarGridSpec(
            num_scalar_prefetch=0,
            grid=(nb,),
            in_specs=[
                pl.BlockSpec((block_b, Kp), lambda i: (i, 0)),
                pl.BlockSpec((Kp, Hp), lambda i: (0, 0)),
                pl.BlockSpec((1, Hp), lambda i: (0, 0)),
            ],
            out_specs=pl.BlockSpec((block_b, 1), lambda i: (i, 0)),
        ),
        compiler_params=pltpu.CompilerParams(
            dimension_semantics=("parallel",),
        ),
    )(x, W1, W2)
    return q[:B]


def critic_forward_ref(states, actions, w1_s, w1_a, b1, lin_w, lin_b):
    y = jnp.maximum(states @ w1_s + actions @ w1_a + b1, 0.0)
    return y @ lin_w.T + lin_b


if __name__ == "__main__":
    B, state_dim, action_dim, H = 8, 16, 4, 300

    key = jax.random.PRNGKey(0)
    k_s, k_a, k_w1s, k_w1a, k_w2 = jax.random.split(key, 5)

    # Deterministic parameter init mirroring the module's __init__:
    #   w1_s, w1_a ~ N(0,1)*0.001 ; b1 = 0 ; linear.weight ~ N(0, 0.001) ; bias = 0
    w1_s = jax.random.normal(k_w1s, (state_dim, H), jnp.float32) * 0.001
    w1_a = jax.random.normal(k_w1a, (action_dim, H), jnp.float32) * 0.001
    b1 = jnp.zeros((1, H), jnp.float32)
    lin_w = jax.random.normal(k_w2, (1, H), jnp.float32) * 0.001   # linear.weight
    lin_b = jnp.zeros((1,), jnp.float32)                           # linear.bias

    states = jax.random.normal(k_s, (B, state_dim), jnp.float32)
    actions = jax.random.normal(k_a, (B, action_dim), jnp.float32)

    q = critic_forward(states, actions, w1_s, w1_a, b1, lin_w, lin_b)
    q = jax.block_until_ready(q)

    q_ref = critic_forward_ref(states, actions, w1_s, w1_a, b1, lin_w, lin_b)
    assert q.shape == (B, 1)
    assert jnp.allclose(q, q_ref, atol=1e-5, rtol=1e-5)

    print("KERNEL_OK")
</pallas_src>

<mosaic_0001>
module attributes {stable_mosaic.version = 11 : i64} {
  func.func @critic_kernel(%arg0: i32, %arg1: memref<8x24xf32, #tpu.memory_space<vmem>>, %arg2: memref<24x384xf32, #tpu.memory_space<vmem>>, %arg3: memref<1x384xf32, #tpu.memory_space<vmem>>, %arg4: memref<8x1xf32, #tpu.memory_space<vmem>>) attributes {dimension_semantics = [#tpu.dimension_semantics<parallel>], iteration_bounds = array<i64: 1>, scalar_prefetch = 0 : i64, scratch_operands = 0 : i64, tpu.core_type = #tpu.core_type<tc>, window_params = [{transform_indices = @transform_0, window_bounds = array<i64: 8, 24>}, {pipeline_mode = #tpu.pipeline_mode<synchronous>, transform_indices = @transform_1, window_bounds = array<i64: 24, 384>}, {pipeline_mode = #tpu.pipeline_mode<synchronous>, transform_indices = @transform_2, window_bounds = array<i64: 1, 384>}, {transform_indices = @transform_3, window_bounds = array<i64: 8, 1>}]} {
    %c0 = arith.constant 0 : index
    %c0_0 = arith.constant 0 : index
    %0 = vector.load %arg1[%c0, %c0_0] : memref<8x24xf32, #tpu.memory_space<vmem>>, vector<8x24xf32>
    %c0_1 = arith.constant 0 : index
    %c0_2 = arith.constant 0 : index
    %1 = vector.load %arg2[%c0_1, %c0_2] : memref<24x384xf32, #tpu.memory_space<vmem>>, vector<24x384xf32>
    %cst = arith.constant dense<0.000000e+00> : vector<8x384xf32>
    %2 = tpu.matmul %0, %1, %cst {dimension_numbers = #tpu.dot_dimension_numbers<[1], [0], [0], [1], [0, 0, 1, 1], [], []>} : vector<8x24xf32>, vector<24x384xf32>, vector<8x384xf32> -> vector<8x384xf32>
    %cst_3 = arith.constant 0.000000e+00 : f32
    %3 = vector.broadcast %cst_3 : f32 to vector<8x384xf32>
    %4 = arith.maximumf %2, %3 : vector<8x384xf32>
    %c0_4 = arith.constant 0 : index
    %c0_5 = arith.constant 0 : index
    %5 = vector.load %arg3[%c0_4, %c0_5] : memref<1x384xf32, #tpu.memory_space<vmem>>, vector<1x384xf32>
    %6 = vector.broadcast %5 : vector<1x384xf32> to vector<8x384xf32>
    %7 = arith.mulf %4, %6 : vector<8x384xf32>
    %cst_6 = arith.constant dense<0.000000e+00> : vector<8xf32>
    %8 = vector.multi_reduction <add>, %7, %cst_6 [1] : vector<8x384xf32> to vector<8xf32>
    %9 = vector.shape_cast %8 : vector<8xf32> to vector<8x1xf32>
    %c0_7 = arith.constant 0 : index
    %c0_8 = arith.constant 0 : index
    %10 = vector.load %arg4[%c0_7, %c0_8] : memref<8x1xf32, #tpu.memory_space<vmem>>, vector<8x1xf32>
    tpu.vector_store %arg4[%c0_7, %c0_8], %9 {strides = array<i32>} : memref<8x1xf32, #tpu.memory_space<vmem>>, vector<8x1xf32>,
    return
  }
  func.func @transform_0(%arg0: i32) -> (i32, i32) {
    %c0_i32 = arith.constant 0 : i32
    %c0_i32_0 = arith.constant 0 : i32
    return %arg0, %c0_i32 : i32, i32
  }
  func.func @transform_1(%arg0: i32) -> (i32, i32) {
    %c0_i32 = arith.constant 0 : i32
    %c0_i32_0 = arith.constant 0 : i32
    %c0_i32_1 = arith.constant 0 : i32
    return %c0_i32, %c0_i32_0 : i32, i32
  }
  func.func @transform_2(%arg0: i32) -> (i32, i32) {
    %c0_i32 = arith.constant 0 : i32
    %c0_i32_0 = arith.constant 0 : i32
    %c0_i32_1 = arith.constant 0 : i32
    return %c0_i32, %c0_i32_0 : i32, i32
  }
  func.func @transform_3(%arg0: i32) -> (i32, i32) {
    %c0_i32 = arith.constant 0 : i32
    %c0_i32_0 = arith.constant 0 : i32
    return %arg0, %c0_i32 : i32, i32
  }
}

</mosaic_0001>

<llo_original>
// kernel: tpu_custom_call.1
$region0: #{tpu_custom_call.1}
  #allocation0 [shape = 'u32[]', space=smem, size = 0x4, offset = 0x4, fixed_abs, tag = 'smem constant byte address 0x4 - core index']
  #allocation1 [shape = 'u32[144,128]{1,0:T(1,128)}', space=vmem, size = 0x12000, scoped, tag = 'internal scratch']
  %s0 = inlined_call_operand.hbm [shape: f32[8,24], index: 0, kind: input, shape index: {}]
  %s1 = inlined_call_operand.hbm [shape: f32[24,384], index: 1, kind: input, shape index: {}]
  %s2 = inlined_call_operand.vmem [shape: f32[1,384], index: 2, kind: input, shape index: {}]
  %s3 = inlined_call_operand.vmem [shape: f32[8,1], index: 3, kind: output, shape index: {}]
  %s4 = sld [smem:[#allocation0]]
  $region30: #{tpu_custom_call.1} parent=0
    _
  %s6 = ssub.s32 1, %s4
  %s7 = scalar_select 0, %s6, %s4
  $region1: #{tpu_custom_call.1} parent=0
    #allocation2 [shape = 'u8[4096]{0}', space=vmem, size = 0x1000, scoped, tag = 'input window, operand 0, single buffered']
    #allocation3 [shape = 's32[1]{0}', space=sflag, size = 0x4, scoped, tag = 'scoped memory for tpu_custom_call.1']
    #allocation4 [shape = 'u8[36864]{0}', space=vmem, size = 0x9000, scoped, tag = 'input window, operand 1, single buffered']
    #allocation5 [shape = 's32[1]{0}', space=sflag, size = 0x4, scoped, tag = 'scoped memory for tpu_custom_call.1']
    %8 = vsyncpa [#allocation3], 0
    %9 = vsyncpa [#allocation5], 0
    // Predicated region
    $region2: #{tpu_custom_call.1} parent=1 // pred_check
      _
    $region3: #{tpu_custom_call.1} parent=1 // pred_check_branch
      %11 = sbr.rel (0) target = $region5
    $region4: #{tpu_custom_call.1} parent=1 // pred_region
      %s13 = ssub.s32 128, 128
      %14 = vsyncadd [#allocation3], %s13
      %s16 = sshll.u32 [#allocation2], 4
      %s17 = int_to_ptr.vmem [resolvable:$true] %s16
      %19 = dma.hbm_to_vmem [thread:$0]  %s0, 128, %s17, [#allocation3]
    $region5: #{tpu_custom_call.1} parent=1 // pred_fallthru
      _
    // Predicated region
    $region6: #{tpu_custom_call.1} parent=1 // pred_check
      _
    $region7: #{tpu_custom_call.1} parent=1 // pred_check_branch
      %21 = sbr.rel (0) target = $region9
    $region8: #{tpu_custom_call.1} parent=1 // pred_region
      %s23 = ssub.s32 1152, 1152
      %24 = vsyncadd [#allocation5], %s23
      %s25 = sshll.u32 [#allocation4], 4
      %s26 = int_to_ptr.vmem [resolvable:$true] %s25
      %31 = dma.hbm_to_vmem [thread:$0]  %s1, 1152, %s26, [#allocation5], 384, 384, 24
    $region9: #{tpu_custom_call.1} parent=1 // pred_fallthru
      _
    // Predicated region
    $region10: #{tpu_custom_call.1} parent=1 // pred_check
      _
    $region11: #{tpu_custom_call.1} parent=1 // pred_check_branch
      %33 = sbr.rel (0) target = $region13
    $region12: #{tpu_custom_call.1} parent=1 // pred_region
      _
    $region13: #{tpu_custom_call.1} parent=1 // pred_fallthru
      _
    // Predicated region
    $region14: #{tpu_custom_call.1} parent=1 // pred_check
      _
    $region15: #{tpu_custom_call.1} parent=1 // pred_check_branch
      %35 = sbr.rel (0) target = $region17
    $region16: #{tpu_custom_call.1} parent=1 // pred_region
      %36 = dma.done [#allocation3], 128
    $region17: #{tpu_custom_call.1} parent=1 // pred_fallthru
      _
    // Predicated region
    $region18: #{tpu_custom_call.1} parent=1 // pred_check
      _
    $region19: #{tpu_custom_call.1} parent=1 // pred_check_branch
      %38 = sbr.rel (0) target = $region21
    $region20: #{tpu_custom_call.1} parent=1 // pred_region
      %39 = dma.done [#allocation5], 1152
    $region21: #{tpu_custom_call.1} parent=1 // pred_fallthru
      _
    %v40 = vld [vmem:[#allocation2] sm:$0xff]
    %v41 = vld [vmem:[#allocation4] sm:$0xff]
    %v42 = vld [vmem:[#allocation4 + $0x8] sm:$0xff]
    %v43 = vld [vmem:[#allocation4 + $0x10] sm:$0xff]
    %v44 = vld [vmem:[#allocation4 + $0x18] sm:$0xff]
    %v45 = vld [vmem:[#allocation4 + $0x20] sm:$0xff]
    %v46 = vld [vmem:[#allocation4 + $0x28] sm:$0xff]
    %v47 = vld [vmem:[#allocation4 + $0x30] sm:$0xff]
    %v48 = vld [vmem:[#allocation4 + $0x38] sm:$0xff]
    %v49 = vld [vmem:[#allocation4 + $0x40] sm:$0xff]
    %vm50 = vcmask 195584
    %v52 = vsel %vm50, %v40, 0
    %54 = vmatprep.subr.mxu0 %v42
    %55 = vmatpush1.msra.mxu0 %v41
    %56 = vmatprep.subr.mxu0 %v45
    %57 = vmatpush1.msra.mxu0 %v44
    %58 = vmatprep.subr.mxu0 %v48
    %59 = vmatpush1.msra.mxu0 %v47
    %60 = vmatprep.subr.mxu0 0.0
    %61 = vmatpush1.msra.mxu0 0.0
    %62 = vmatprep.subr.mxu0 0.0
    %63 = vmatpush1.msra.mxu0 0.0
    %64 = vmatprep.subr.mxu0 0.0
    %65 = vmatpush1.msra.mxu0 0.0
    %66 = vmatprep.subr.mxu0 0.0
    %67 = vmatpush1.msra.mxu0 0.0
    %68 = vmatprep.subr.mxu0 0.0
    %69 = vmatpush1.msra.mxu0 0.0
    %70 = vmatprep.subr.mxu0 0.0
    %71 = vmatpush1.msra.mxu0 0.0
    %72 = vmatprep.subr.mxu0 0.0
    %73 = vmatpush1.msra.mxu0 0.0
    %74 = vmatprep.subr.mxu0 0.0
    %75 = vmatpush1.msra.mxu0 0.0
    %76 = vmatprep.subr.mxu0 0.0
    %77 = vmatpush1.msra.mxu0 0.0
    %78 = vmatprep.subr.mxu0 0.0
    %79 = vmatpush1.msra.mxu0 0.0
    %80 = vmatprep.subr.mxu0 0.0
    %81 = vmatpush1.msra.mxu0 0.0
    %82 = vmatprep.subr.mxu0 0.0
    %83 = vmatpush1.msra.mxu0 0.0
    %84 = vmatprep.subr.mxu0 0.0
    %85 = vmatpush1.msra.mxu0 0.0
    %86 = vmatprep.subr.mxu0 0.0
    %87 = vmatpush1.msra.mxu0 0.0
    %88 = vmatprep.subr.mxu0 0.0
    %89 = vmatpush1.msra.mxu0 0.0
    %90 = vmatprep.subr.mxu0 0.0
    %91 = vmatpush1.msra.mxu0 0.0
    %92 = vmatprep.subr.mxu0 0.0
    %93 = vmatpush1.msra.mxu0 0.0
    %94 = vmatprep.subr.mxu0 0.0
    %95 = vmatpush1.msra.mxu0 0.0
    %96 = vmatprep.subr.mxu0 0.0
    %97 = vmatpush1.msra.mxu0 0.0
    %98 = vmatprep.subr.mxu0 0.0
    %99 = vmatpush1.msra.mxu0 0.0
    %100 = vmatprep.subr.mxu0 0.0
    %101 = vmatpush1.msra.mxu0 0.0
    %102 = vmatprep.subr.mxu0 0.0
    %103 = vmatpush1.msra.mxu0 0.0
    %104 = vmatprep.subr.mxu0 0.0
    %105 = vmatpush1.msra.mxu0 0.0
    %106 = vmatprep.subr.mxu0 0.0
    %107 = vmatpush1.msra.mxu0 0.0
    %108 = vmatprep.subr.mxu0 0.0
    %109 = vmatpush1.msra.mxu0 0.0
    %110 = vmatprep.subr.mxu0 0.0
    %111 = vmatpush1.msra.mxu0 0.0
    %112 = vmatprep.subr.mxu0 0.0
    %113 = vmatpush1.msra.mxu0 0.0
    %114 = vmatprep.subr.mxu0 0.0
    %115 = vmatpush1.msra.mxu0 0.0
    %116 = vmatprep.subr.mxu0 0.0
    %117 = vmatpush1.msra.mxu0 0.0
    %118 = vmatprep.mubr.f32.mxu0 0.0
    %119 = vmatmul.mubr.f32.gmra.mrb[0].mxu0 %v52
    %v120 = vpop.f32.mrb[0].mxu0
    %v121 = vadd.f32 0.0, %v120
    %v122 = vpop.f32.mrb[0].mxu0
    %v123 = vadd.f32 0.0, %v122
    %124 = vdwg.mxu0
    %125 = vmatprep.subr.mxu0 0.0
    %126 = vmatpush1.msra.mxu0 %v43
    %127 = vmatprep.subr.mxu0 0.0
    %128 = vmatpush1.msra.mxu0 %v46
    %129 = vmatprep.subr.mxu0 0.0
    %130 = vmatpush1.msra.mxu0 %v49
    %131 = vmatprep.subr.mxu0 0.0
    %132 = vmatpush1.msra.mxu0 0.0
    %133 = vmatprep.subr.mxu0 0.0
    %134 = vmatpush1.msra.mxu0 0.0
    %135 = vmatprep.subr.mxu0 0.0
    %136 = vmatpush1.msra.mxu0 0.0
    %137 = vmatprep.subr.mxu0 0.0
    %138 = vmatpush1.msra.mxu0 0.0
    %139 = vmatprep.subr.mxu0 0.0
    %140 = vmatpush1.msra.mxu0 0.0
    %141 = vmatprep.subr.mxu0 0.0
    %142 = vmatpush1.msra.mxu0 0.0
    %143 = vmatprep.subr.mxu0 0.0
    %144 = vmatpush1.msra.mxu0 0.0
    %145 = vmatprep.subr.mxu0 0.0
    %146 = vmatpush1.msra.mxu0 0.0
    %147 = vmatprep.subr.mxu0 0.0
    %148 = vmatpush1.msra.mxu0 0.0
    %149 = vmatprep.subr.mxu0 0.0
    %150 = vmatpush1.msra.mxu0 0.0
    %151 = vmatprep.subr.mxu0 0.0
    %152 = vmatpush1.msra.mxu0 0.0
    %153 = vmatprep.subr.mxu0 0.0
    %154 = vmatpush1.msra.mxu0 0.0
    %155 = vmatprep.subr.mxu0 0.0
    %156 = vmatpush1.msra.mxu0 0.0
    %157 = vmatprep.subr.mxu0 0.0
    %158 = vmatpush1.msra.mxu0 0.0
    %159 = vmatprep.subr.mxu0 0.0
    %160 = vmatpush1.msra.mxu0 0.0
    %161 = vmatprep.subr.mxu0 0.0
    %162 = vmatpush1.msra.mxu0 0.0
    %163 = vmatprep.subr.mxu0 0.0
    %164 = vmatpush1.msra.mxu0 0.0
    %165 = vmatprep.subr.mxu0 0.0
    %166 = vmatpush1.msra.mxu0 0.0
    %167 = vmatprep.subr.mxu0 0.0
    %168 = vmatpush1.msra.mxu0 0.0
    %169 = vmatprep.subr.mxu0 0.0
    %170 = vmatpush1.msra.mxu0 0.0
    %171 = vmatprep.subr.mxu0 0.0
    %172 = vmatpush1.msra.mxu0 0.0
    %173 = vmatprep.subr.mxu0 0.0
    %174 = vmatpush1.msra.mxu0 0.0
    %175 = vmatprep.subr.mxu0 0.0
    %176 = vmatpush1.msra.mxu0 0.0
    %177 = vmatprep.subr.mxu0 0.0
    %178 = vmatpush1.msra.mxu0 0.0
    %179 = vmatprep.subr.mxu0 0.0
    %180 = vmatpush1.msra.mxu0 0.0
    %181 = vmatprep.subr.mxu0 0.0
    %182 = vmatpush1.msra.mxu0 0.0
    %183 = vmatprep.subr.mxu0 0.0
    %184 = vmatpush1.msra.mxu0 0.0
    %185 = vmatprep.subr.mxu0 0.0
    %186 = vmatpush1.msra.mxu0 0.0
    %187 = vmatprep.subr.mxu0 0.0
    %188 = vmatpush1.msra.mxu0 0.0
    %189 = vmatprep.mubr.f32.mxu0 0.0
    %190 = vmatmul.mubr.f32.gmra.mrb[0].mxu0 %v52
    %v191 = vpop.f32.mrb[0].mxu0
    %v192 = vadd.f32 0.0, %v191
    %v193 = vpop.f32.mrb[0].mxu0
    %194 = vdwg.mxu0
    %v195 = vmax.f32 %v121, 0.0
    %v196 = vmax.f32 %v123, 0.0
    %v197 = vmax.f32 %v192, 0.0
    %v198 = vld [vmem:[%s2] sm:$0x7]
    %v200 = vlaneseq
    %v201 = vshrl.u32 %v200, 7
    %v202 = vsub.s32 0, %v201
    %v203 = vrot.slane %v198, %v202
    %v204 = vlaneseq
    %v205 = vshrl.u32 %v204, 7
    %v206 = vsub.s32 1, %v205
    %v207 = vrot.slane %v198, %v206
    %v208 = vlaneseq
    %v209 = vshrl.u32 %v208, 7
    %v210 = vsub.s32 2, %v209
    %v211 = vrot.slane %v198, %v210
    %v215 = vmul.f32 %v195, %v203
    %v216 = vmul.f32 %v196, %v207
    %v217 = vmul.f32 %v197, %v211
    %v218 = vadd.f32 %v215, %v216
    %v219 = vadd.f32 %v218, %v217
    %220 = vadd.xlane.f32.xlu0 %v219
    %v221 = vpop.xlane.xlu0 %220
    %vm222 = vcmask 7168
    %223 = vst.msk [vmem:[%s3] sm:$0xff] %vm222, %v221
    // Predicated region
    $region22: #{tpu_custom_call.1} parent=1 // pred_check
      _
    $region23: #{tpu_custom_call.1} parent=1 // pred_check_branch
      %225 = sbr.rel (0) target = $region25
    $region24: #{tpu_custom_call.1} parent=1 // pred_region
      _
    $region25: #{tpu_custom_call.1} parent=1 // pred_fallthru
      _
    // Predicated region
    $region26: #{tpu_custom_call.1} parent=1 // pred_check
      _
    $region27: #{tpu_custom_call.1} parent=1 // pred_check_branch
      %227 = sbr.rel (0) target = $region29
    $region28: #{tpu_custom_call.1} parent=1 // pred_region
      _
    $region29: #{tpu_custom_call.1} parent=1 // pred_fallthru
      _
    %228 = vsyncpa [#allocation3], 1
    %229 = vsyncpa [#allocation5], 1

</llo_original>
